<compile_context>
chip_gen: v5e
topology: v5e:2x2
jax: 0.10.0
libtpu: 0.0.40
codegen_flags: <defaults>
</compile_context>

<pallas_src>
import numpy as np
import jax
import jax.numpy as jnp
from jax import lax
from jax.experimental import pallas as pl
from jax.experimental.pallas import tpu as pltpu

EPS = 1e-8
_GRAY_W = (0.2989, 0.587, 0.114)  # torchvision rgb_to_grayscale weights

# Reference-only tap tables (used by the pure-JAX validator).
SOBEL_X = ((-1.0, 0.0, 1.0), (-2.0, 0.0, 2.0), (-1.0, 0.0, 1.0))
SOBEL_Y = ((-1.0, -2.0, -1.0), (0.0, 0.0, 0.0), (1.0, 2.0, 1.0))

_ROLL_MODE = None  # "roll" | "roll_flipped" | "concat"


def _probe_roll_mode():
    """One-time probe of pltpu.roll's rotate direction on this backend.

    Expected: pltpu.roll == jnp.roll (out[i] = in[i - shift]).  If the lowering
    is flipped or unavailable we adapt / fall back, keeping numerics identical.
    """
    global _ROLL_MODE
    if _ROLL_MODE is None:
        x = jnp.arange(8 * 128, dtype=jnp.float32).reshape(8, 128)

        def probe_kernel(x_ref, o_ref):
            o_ref[...] = pltpu.roll(x_ref[...], 1, axis=1)

        try:
            rolled = pl.pallas_call(
                probe_kernel,
                out_shape=jax.ShapeDtypeStruct((8, 128), jnp.float32))(x)
            if bool(jnp.array_equal(rolled, jnp.roll(x, 1, axis=1))):
                _ROLL_MODE = "roll"
            elif bool(jnp.array_equal(rolled, jnp.roll(x, -1, axis=1))):
                _ROLL_MODE = "roll_flipped"
            else:
                _ROLL_MODE = "concat"
        except Exception:  # lowering unavailable -> safe (slower) fallback
            _ROLL_MODE = "concat"
    return _ROLL_MODE


def _choose_group(num_imgs, c_in, HW, target_bytes=2 << 20):
    """Images per grid block: ~2 MiB of input per step, sublane-aligned."""
    per_img = 4 * c_in * HW
    g = max(1, target_bytes // per_img)
    if g >= num_imgs:
        g = num_imgs
        if num_imgs >= 16:          # keep >=2 blocks so both v7x TCs get work
            g = max(8, (num_imgs // 2) // 8 * 8)
    elif g >= 8:
        g = (g // 8) * 8            # aligned sublane blocks
    return g


def _make_kernel(c_in, W, HW, gray_w, G, num_imgs, num_blocks, roll_mode):
    ragged = (num_blocks * G != num_imgs)

    def shift(x, offset):
        """out[:, p] = x[:, p + offset]; wrapped / junction lanes are masked by
        the caller (the boundary masks cover exactly those positions)."""
        L = x.shape[-1]
        if roll_mode == "roll":
            return pltpu.roll(x, (-offset) % L, axis=1)
        if roll_mode == "roll_flipped":
            return pltpu.roll(x, offset % L, axis=1)
        zeros = jnp.zeros((x.shape[0], abs(offset)), jnp.float32)
        if offset > 0:
            return jnp.concatenate([x[:, offset:], zeros], axis=1)
        return jnp.concatenate([zeros, x[:, :offset]], axis=1)

    def gray(blk):
        # Channels live at static lane offsets c*HW (tile aligned when
        # HW % 128 == 0); bf16 inputs are upcast to f32 here.
        if c_in == 1:
            return blk.astype(jnp.float32)
        x = blk[:, 0:HW].astype(jnp.float32) * jnp.float32(gray_w[0])
        for c in range(1, c_in):
            x = x + (blk[:, c * HW:(c + 1) * HW].astype(jnp.float32)
                     * jnp.float32(gray_w[c]))
        return x

    def kernel(pred_ref, gt_ref, mask_ref, out_ref):
        m_ncf = mask_ref[0:1, :]   # 0.0 where column j == 0
        m_ncl = mask_ref[1:2, :]   # 0.0 where column j == W-1
        m_nrf = mask_ref[2:3, :]   # 0.0 where row    i == 0
        m_nrl = mask_ref[3:4, :]   # 0.0 where row    i == H-1

        # Shared shift pipeline: pred in lanes [0, HW), gt in lanes [HW, 2HW).
        x = jnp.concatenate([gray(pred_ref[...]), gray(gt_ref[...])], axis=1)

        # Vertical pass: [1,2,1] smoothing and [-1,0,1] gradient along H.
        x_dn = shift(x, W) * m_nrl     # x[i+1, j]  (0 below the last row)
        x_up = shift(x, -W) * m_nrf    # x[i-1, j]  (0 above the first row)
        sm_v = x_up + 2.0 * x + x_dn
        df_v = x_dn - x_up

        # Horizontal pass (masks emulate the conv's zero column padding).
        sm_l = shift(sm_v, 1) * m_ncl    # sm_v[i, j+1]
        sm_r = shift(sm_v, -1) * m_ncf   # sm_v[i, j-1]
        df_l = shift(df_v, 1) * m_ncl
        df_r = shift(df_v, -1) * m_ncf

        gx = sm_l - sm_r                 # conv2d(sobel_x, padding=1)
        gy = df_r + 2.0 * df_v + df_l    # conv2d(sobel_y, padding=1)
        mag = jnp.sqrt(gx * gx + gy * gy + jnp.float32(EPS))

        diff = jnp.abs(mag[:, :HW] - mag[:, HW:])          # (G, HW)
        if ragged:
            # Last block may contain unspecified rows past num_imgs; drop them.
            img_idx = (pl.program_id(0) * G
                       + lax.broadcasted_iota(jnp.int32, (G, HW), 0))
            diff = jnp.where(img_idx < num_imgs, diff, 0.0)
        out_ref[...] = jnp.sum(diff).reshape(1, 1, 1)

    return kernel


def sobel_loss(pred, gt, *, group_size=None):
    """Equivalent of Sobel_loss.forward(pred, gt); inputs are NCHW."""
    assert pred.shape == gt.shape and pred.ndim == 4
    N, C, H, W = pred.shape
    HW = H * W

    if C == 3:
        c_in, num_imgs, gray_w = 3, N, _GRAY_W
        p = pred.reshape(N, 3 * HW)          # free row-major reshape
        g = gt.reshape(N, 3 * HW)
    else:
        # PyTorch applies the 1-channel conv directly; fold C into the batch.
        c_in, num_imgs, gray_w = 1, N * C, (1.0,)
        p = pred.reshape(N * C, HW)
        g = gt.reshape(N * C, HW)

    if group_size is None:
        G = _choose_group(num_imgs, c_in, HW)
    else:
        G = max(1, min(int(group_size), num_imgs))
    num_blocks = -(-num_imgs // G)           # cdiv; ragged tail masked in-kernel

    # Boundary masks over the doubled (pred|gt) lane axis; stay VMEM-resident.
    pos = np.arange(2 * HW)
    col = pos % W
    row = (pos % HW) // W
    mask = jnp.asarray(np.stack([
        col != 0, col != W - 1, row != 0, row != H - 1,
    ]).astype(np.float32))                   # (4, 2*HW)

    roll_mode = _probe_roll_mode() if (2 * HW) % 128 == 0 else "concat"
    kernel = _make_kernel(c_in, W, HW, gray_w, G, num_imgs, num_blocks,
                          roll_mode)
    img_spec = pl.BlockSpec((G, c_in * HW), lambda i: (i, 0))

    partials = pl.pallas_call(
        kernel,
        out_shape=jax.ShapeDtypeStruct((num_blocks, 1, 1), jnp.float32),
        grid_spec=pltpu.PrefetchScalarGridSpec(
            num_scalar_prefetch=0,
            grid=(num_blocks,),
            in_specs=[
                img_spec,
                img_spec,
                pl.BlockSpec((4, 2 * HW), lambda i: (0, 0)),  # resident masks
            ],
            out_specs=pl.BlockSpec((1, 1, 1), lambda i: (i, 0, 0)),
        ),
        compiler_params=pltpu.CompilerParams(
            dimension_semantics=("parallel",),
            vmem_limit_bytes=48 * 1024 * 1024,
        ),
    )(p, g, mask)

    denom = jnp.float32(num_imgs * HW)       # true element count (no padding)
    return jnp.sum(partials) / denom


# ----------------------------- pure-JAX reference ---------------------------
def _to_gray(x):
    if x.shape[1] == 3:
        w = jnp.array(_GRAY_W, dtype=jnp.float32).reshape(1, 3, 1, 1)
        return jnp.sum(x * w, axis=1, keepdims=True)
    return x


def _sobel_loss_ref(pred, gt):
    def apply(x):
        _, _, H, W = x.shape
        xp = jnp.pad(x, ((0, 0), (0, 0), (1, 1), (1, 1)))
        gx = jnp.zeros_like(x)
        gy = jnp.zeros_like(x)
        for ky in range(3):
            for kx in range(3):
                tap = xp[:, :, ky:ky + H, kx:kx + W]
                gx = gx + SOBEL_X[ky][kx] * tap
                gy = gy + SOBEL_Y[ky][kx] * tap
        return jnp.sqrt(gx * gx + gy * gy + EPS)

    p = _to_gray(pred.astype(jnp.float32))
    g = _to_gray(gt.astype(jnp.float32))
    return jnp.mean(jnp.abs(apply(p) - apply(g)))


if __name__ == "__main__":
    key = jax.random.PRNGKey(0)
    ks = jax.random.split(key, 6)

    # C == 1 path (conv applied directly; channels folded into the batch).
    pred1 = jax.random.normal(ks[0], (2, 1, 16, 16), dtype=jnp.float32)
    gt1 = jax.random.normal(ks[1], (2, 1, 16, 16), dtype=jnp.float32)
    out1 = jax.block_until_ready(sobel_loss(pred1, gt1))
    ref1 = jax.block_until_ready(_sobel_loss_ref(pred1, gt1))
    assert jnp.allclose(out1, ref1, rtol=1e-5, atol=1e-5), (out1, ref1)

    # C == 3 path (grayscale fused in-kernel, channels at lane offsets).
    pred3 = jax.random.normal(ks[2], (2, 3, 16, 16), dtype=jnp.float32)
    gt3 = jax.random.normal(ks[3], (2, 3, 16, 16), dtype=jnp.float32)
    out3 = jax.block_until_ready(sobel_loss(pred3, gt3))
    ref3 = jax.block_until_ready(_sobel_loss_ref(pred3, gt3))
    assert jnp.allclose(out3, ref3, rtol=1e-5, atol=1e-5), (out3, ref3)

    # Multi-block + ragged last block (validity mask instead of jnp.pad).
    pred_r = jax.random.normal(ks[4], (10, 1, 16, 16), dtype=jnp.float32)
    gt_r = jax.random.normal(ks[5], (10, 1, 16, 16), dtype=jnp.float32)
    out_r = jax.block_until_ready(sobel_loss(pred_r, gt_r, group_size=8))
    ref_r = jax.block_until_ready(_sobel_loss_ref(pred_r, gt_r))
    assert jnp.allclose(out_r, ref_r, rtol=1e-5, atol=1e-5), (out_r, ref_r)

    # bf16 inputs stay bf16 in HBM; the kernel upcasts to f32 internally.
    out_b = jax.block_until_ready(
        sobel_loss(pred3.astype(jnp.bfloat16), gt3.astype(jnp.bfloat16)))
    ref_b = jax.block_until_ready(
        _sobel_loss_ref(pred3.astype(jnp.bfloat16), gt3.astype(jnp.bfloat16)))
    assert jnp.allclose(out_b, ref_b, rtol=1e-4, atol=1e-4), (out_b, ref_b)

    print("KERNEL_OK")
</pallas_src>

<mosaic_0001>
module attributes {stable_mosaic.version = 11 : i64} {
  func.func @probe_kernel(%arg0: memref<8x128xf32, #tpu.memory_space<vmem>>, %arg1: memref<8x128xf32, #tpu.memory_space<vmem>>) attributes {dimension_semantics = [], scalar_prefetch = 0 : i64, scratch_operands = 0 : i64, tpu.core_type = #tpu.core_type<tc>} {
    %c0 = arith.constant 0 : index
    %c0_0 = arith.constant 0 : index
    %0 = vector.load %arg0[%c0, %c0_0] : memref<8x128xf32, #tpu.memory_space<vmem>>, vector<8x128xf32>
    %c1_i32 = arith.constant 1 : i32
    %1 = tpu.dynamic_rotate %0 by %c1_i32 dim 1 : vector<8x128xf32>, i32 -> vector<8x128xf32>
    %c0_1 = arith.constant 0 : index
    %c0_2 = arith.constant 0 : index
    %2 = vector.load %arg1[%c0_1, %c0_2] : memref<8x128xf32, #tpu.memory_space<vmem>>, vector<8x128xf32>
    tpu.vector_store %arg1[%c0_1, %c0_2], %1 {strides = array<i32>} : memref<8x128xf32, #tpu.memory_space<vmem>>, vector<8x128xf32>,
    return
  }
}

module attributes {stable_mosaic.version = 11 : i64} {
  func.func @kernel(%arg0: i32, %arg1: memref<2x256xf32, #tpu.memory_space<vmem>>, %arg2: memref<2x256xf32, #tpu.memory_space<vmem>>, %arg3: memref<4x512xf32, #tpu.memory_space<vmem>>, %arg4: memref<1x1x1xf32, #tpu.memory_space<vmem>>) attributes {dimension_semantics = [#tpu.dimension_semantics<parallel>], iteration_bounds = array<i64: 1>, scalar_prefetch = 0 : i64, scratch_operands = 0 : i64, tpu.core_type = #tpu.core_type<tc>, window_params = [{transform_indices = @transform_0, window_bounds = array<i64: 2, 256>}, {transform_indices = @transform_1, window_bounds = array<i64: 2, 256>}, {pipeline_mode = #tpu.pipeline_mode<synchronous>, transform_indices = @transform_2, window_bounds = array<i64: 4, 512>}, {transform_indices = @transform_3, window_bounds = array<i64: 1, 1, 1>}]} {
    %c0 = arith.constant 0 : index
    %c0_0 = arith.constant 0 : index
    %0 = vector.load %arg3[%c0, %c0_0] : memref<4x512xf32, #tpu.memory_space<vmem>>, vector<1x512xf32>
    %c1 = arith.constant 1 : index
    %c0_1 = arith.constant 0 : index
    %1 = vector.load %arg3[%c1, %c0_1] : memref<4x512xf32, #tpu.memory_space<vmem>>, vector<1x512xf32>
    %c2 = arith.constant 2 : index
    %c0_2 = arith.constant 0 : index
    %2 = vector.load %arg3[%c2, %c0_2] : memref<4x512xf32, #tpu.memory_space<vmem>>, vector<1x512xf32>
    %c3 = arith.constant 3 : index
    %c0_3 = arith.constant 0 : index
    %3 = vector.load %arg3[%c3, %c0_3] : memref<4x512xf32, #tpu.memory_space<vmem>>, vector<1x512xf32>
    %c0_4 = arith.constant 0 : index
    %c0_5 = arith.constant 0 : index
    %4 = vector.load %arg1[%c0_4, %c0_5] : memref<2x256xf32, #tpu.memory_space<vmem>>, vector<2x256xf32>
    %c0_6 = arith.constant 0 : index
    %c0_7 = arith.constant 0 : index
    %5 = vector.load %arg2[%c0_6, %c0_7] : memref<2x256xf32, #tpu.memory_space<vmem>>, vector<2x256xf32>
    %6 = tpu.concatenate %4, %5 in 1 : vector<2x256xf32>, vector<2x256xf32> -> vector<2x512xf32>
    %cst = arith.constant 0.000000e+00 : f32
    %7 = vector.broadcast %cst : f32 to vector<2x16xf32>
    %8 = vector.extract_strided_slice %6 {offsets = [0, 16], sizes = [2, 496], strides = [1, 1]} : vector<2x512xf32> to vector<2x496xf32>
    %9 = tpu.concatenate %8, %7 in 1 : vector<2x496xf32>, vector<2x16xf32> -> vector<2x512xf32>
    %10 = vector.broadcast %3 : vector<1x512xf32> to vector<2x512xf32>
    %11 = arith.mulf %9, %10 : vector<2x512xf32>
    %cst_8 = arith.constant 0.000000e+00 : f32
    %12 = vector.broadcast %cst_8 : f32 to vector<2x16xf32>
    %13 = vector.extract_strided_slice %6 {offsets = [0, 0], sizes = [2, 496], strides = [1, 1]} : vector<2x512xf32> to vector<2x496xf32>
    %14 = tpu.concatenate %12, %13 in 1 : vector<2x16xf32>, vector<2x496xf32> -> vector<2x512xf32>
    %15 = vector.broadcast %2 : vector<1x512xf32> to vector<2x512xf32>
    %16 = arith.mulf %14, %15 : vector<2x512xf32>
    %cst_9 = arith.constant 2.000000e+00 : f32
    %17 = vector.broadcast %cst_9 : f32 to vector<2x512xf32>
    %18 = arith.mulf %17, %6 : vector<2x512xf32>
    %19 = arith.addf %16, %18 : vector<2x512xf32>
    %20 = arith.addf %19, %11 : vector<2x512xf32>
    %21 = arith.subf %11, %16 : vector<2x512xf32>
    %cst_10 = arith.constant 0.000000e+00 : f32
    %22 = vector.broadcast %cst_10 : f32 to vector<2x1xf32>
    %23 = vector.extract_strided_slice %20 {offsets = [0, 1], sizes = [2, 511], strides = [1, 1]} : vector<2x512xf32> to vector<2x511xf32>
    %24 = tpu.concatenate %23, %22 in 1 : vector<2x511xf32>, vector<2x1xf32> -> vector<2x512xf32>
    %25 = vector.broadcast %1 : vector<1x512xf32> to vector<2x512xf32>
    %26 = arith.mulf %24, %25 : vector<2x512xf32>
    %cst_11 = arith.constant 0.000000e+00 : f32
    %27 = vector.broadcast %cst_11 : f32 to vector<2x1xf32>
    %28 = vector.extract_strided_slice %20 {offsets = [0, 0], sizes = [2, 511], strides = [1, 1]} : vector<2x512xf32> to vector<2x511xf32>
    %29 = tpu.concatenate %27, %28 in 1 : vector<2x1xf32>, vector<2x511xf32> -> vector<2x512xf32>
    %30 = vector.broadcast %0 : vector<1x512xf32> to vector<2x512xf32>
    %31 = arith.mulf %29, %30 : vector<2x512xf32>
    %cst_12 = arith.constant 0.000000e+00 : f32
    %32 = vector.broadcast %cst_12 : f32 to vector<2x1xf32>
    %33 = vector.extract_strided_slice %21 {offsets = [0, 1], sizes = [2, 511], strides = [1, 1]} : vector<2x512xf32> to vector<2x511xf32>
    %34 = tpu.concatenate %33, %32 in 1 : vector<2x511xf32>, vector<2x1xf32> -> vector<2x512xf32>
    %35 = vector.broadcast %1 : vector<1x512xf32> to vector<2x512xf32>
    %36 = arith.mulf %34, %35 : vector<2x512xf32>
    %cst_13 = arith.constant 0.000000e+00 : f32
    %37 = vector.broadcast %cst_13 : f32 to vector<2x1xf32>
    %38 = vector.extract_strided_slice %21 {offsets = [0, 0], sizes = [2, 511], strides = [1, 1]} : vector<2x512xf32> to vector<2x511xf32>
    %39 = tpu.concatenate %37, %38 in 1 : vector<2x1xf32>, vector<2x511xf32> -> vector<2x512xf32>
    %40 = vector.broadcast %0 : vector<1x512xf32> to vector<2x512xf32>
    %41 = arith.mulf %39, %40 : vector<2x512xf32>
    %42 = arith.subf %26, %31 : vector<2x512xf32>
    %cst_14 = arith.constant 2.000000e+00 : f32
    %43 = vector.broadcast %cst_14 : f32 to vector<2x512xf32>
    %44 = arith.mulf %43, %21 : vector<2x512xf32>
    %45 = arith.addf %41, %44 : vector<2x512xf32>
    %46 = arith.addf %45, %36 : vector<2x512xf32>
    %47 = arith.mulf %42, %42 : vector<2x512xf32>
    %48 = arith.mulf %46, %46 : vector<2x512xf32>
    %49 = arith.addf %47, %48 : vector<2x512xf32>
    %cst_15 = arith.constant 9.99999993E-9 : f32
    %50 = vector.broadcast %cst_15 : f32 to vector<2x512xf32>
    %51 = arith.addf %49, %50 : vector<2x512xf32>
    %52 = math.sqrt %51 : vector<2x512xf32>
    %53 = vector.extract_strided_slice %52 {offsets = [0, 0], sizes = [2, 256], strides = [1, 1]} : vector<2x512xf32> to vector<2x256xf32>
    %54 = vector.extract_strided_slice %52 {offsets = [0, 256], sizes = [2, 256], strides = [1, 1]} : vector<2x512xf32> to vector<2x256xf32>
    %55 = arith.subf %53, %54 : vector<2x256xf32>
    %56 = math.absf %55 : vector<2x256xf32>
    %57 = vector.shape_cast %56 : vector<2x256xf32> to vector<1x2x256xf32>
    %cst_16 = arith.constant dense<0.000000e+00> : vector<1xf32>
    %58 = vector.multi_reduction <add>, %57, %cst_16 [1, 2] : vector<1x2x256xf32> to vector<1xf32>
    %59 = vector.shape_cast %58 : vector<1xf32> to vector<1x1x1xf32>
    %60 = vector.extract %59[0, 0, 0] : f32 from vector<1x1x1xf32>
    %61 = vector.broadcast %60 : f32 to vector<1x1x1xf32>
    %c0_17 = arith.constant 0 : index
    %c0_18 = arith.constant 0 : index
    %c0_19 = arith.constant 0 : index
    %62 = vector.load %arg4[%c0_17, %c0_18, %c0_19] : memref<1x1x1xf32, #tpu.memory_space<vmem>>, vector<1x1x1xf32>
    tpu.vector_store %arg4[%c0_17, %c0_18, %c0_19], %61 {strides = array<i32>} : memref<1x1x1xf32, #tpu.memory_space<vmem>>, vector<1x1x1xf32>,
    return
  }
  func.func @transform_0(%arg0: i32) -> (i32, i32) {
    %c0_i32 = arith.constant 0 : i32
    %c0_i32_0 = arith.constant 0 : i32
    return %arg0, %c0_i32 : i32, i32
  }
  func.func @transform_1(%arg0: i32) -> (i32, i32) {
    %c0_i32 = arith.constant 0 : i32
    %c0_i32_0 = arith.constant 0 : i32
    return %arg0, %c0_i32 : i32, i32
  }
  func.func @transform_2(%arg0: i32) -> (i32, i32) {
    %c0_i32 = arith.constant 0 : i32
    %c0_i32_0 = arith.constant 0 : i32
    %c0_i32_1 = arith.constant 0 : i32
    return %c0_i32, %c0_i32_0 : i32, i32
  }
  func.func @transform_3(%arg0: i32) -> (i32, i32, i32) {
    %c0_i32 = arith.constant 0 : i32
    %c0_i32_0 = arith.constant 0 : i32
    %c0_i32_1 = arith.constant 0 : i32
    return %arg0, %c0_i32, %c0_i32_0 : i32, i32, i32
  }
}

</mosaic_0001>

<llo_original>
// kernel: tpu_custom_call.1
$region0: #{tpu_custom_call.1}
  #allocation0 [shape = 'u32[]', space=smem, size = 0x4, offset = 0x4, fixed_abs, tag = 'smem constant byte address 0x4 - core index']
  #allocation1 [shape = 'u32[72,128]{1,0:T(1,128)}', space=vmem, size = 0x9000, scoped, tag = 'internal scratch']
  %s0 = inlined_call_operand.hbm [shape: f32[8,128], index: 0, kind: input, shape index: {}]
  %s1 = inlined_call_operand.hbm [shape: f32[8,128], index: 1, kind: output, shape index: {}]
  %s2 = sld [smem:[#allocation0]]
  $region18: #{tpu_custom_call.1} parent=0
    _
  %s4 = ssub.s32 1, %s2
  %s5 = scalar_select 0, %s4, %s2
  $region1: #{tpu_custom_call.1} parent=0
    #allocation2 [shape = 'u8[4096]{0}', space=vmem, size = 0x1000, scoped, tag = 'input window, operand 0, single buffered']
    #allocation3 [shape = 's32[1]{0}', space=sflag, size = 0x4, scoped, tag = 'scoped memory for tpu_custom_call.1']
    #allocation4 [shape = 's32[1]{0}', space=sflag, size = 0x4, scoped, tag = 'scoped memory for tpu_custom_call.1']
    #allocation5 [shape = 'u8[4096]{0}', space=vmem, size = 0x1000, scoped, tag = 'output window, operand 0, single buffered']
    %6 = vsyncpa [#allocation3], 0
    %7 = vsyncpa [#allocation4], 0
    // Predicated region
    $region2: #{tpu_custom_call.1} parent=1 // pred_check
      _
    $region3: #{tpu_custom_call.1} parent=1 // pred_check_branch
      %9 = sbr.rel (0) target = $region5
    $region4: #{tpu_custom_call.1} parent=1 // pred_region
      %11 = vsyncadd [#allocation3], 0
      %s13 = sshll.u32 %s0, 4
      %s14 = int_to_ptr.hbm [resolvable:$true] %s13
      %s15 = sshll.u32 [#allocation2], 4
      %s16 = int_to_ptr.vmem [resolvable:$true] %s15
      %18 = dma.hbm_to_vmem [thread:$0]  %s14, 128, %s16, [#allocation3]
    $region5: #{tpu_custom_call.1} parent=1 // pred_fallthru
      _
    // Predicated region
    $region6: #{tpu_custom_call.1} parent=1 // pred_check
      _
    $region7: #{tpu_custom_call.1} parent=1 // pred_check_branch
      %20 = sbr.rel (0) target = $region9
    $region8: #{tpu_custom_call.1} parent=1 // pred_region
      %22 = dma.done [#allocation3], 128
    $region9: #{tpu_custom_call.1} parent=1 // pred_fallthru
      _
    %v23 = vld [vmem:[#allocation2] sm:$0xff]
    %24 = vrot.lane.b32.xlu0 %v23, 1
    %v25 = vpop.permute.xlu0 %24
    %26 = vst [vmem:[#allocation5] sm:$0xff] %v25
    // Predicated region
    $region10: #{tpu_custom_call.1} parent=1 // pred_check
      _
    $region11: #{tpu_custom_call.1} parent=1 // pred_check_branch
      %28 = sbr.rel (0) target = $region13
    $region12: #{tpu_custom_call.1} parent=1 // pred_region
      %30 = vsyncadd [#allocation4], 0
      %s32 = sshll.u32 [#allocation5], 4
      %s33 = int_to_ptr.vmem [resolvable:$true] %s32
      %s34 = sshll.u32 %s1, 4
      %s35 = int_to_ptr.hbm [resolvable:$true] %s34
      %37 = dma.vmem_to_hbm [thread:$0]  %s33, 128, %s35, [#allocation4]
    $region13: #{tpu_custom_call.1} parent=1 // pred_fallthru
      _
    // Predicated region
    $region14: #{tpu_custom_call.1} parent=1 // pred_check
      _
    $region15: #{tpu_custom_call.1} parent=1 // pred_check_branch
      %39 = sbr.rel (0) target = $region17
    $region16: #{tpu_custom_call.1} parent=1 // pred_region
      %41 = dma.done [#allocation4], 128
    $region17: #{tpu_custom_call.1} parent=1 // pred_fallthru
      _
    %42 = vsyncpa [#allocation3], 1
    %43 = vsyncpa [#allocation4], 1

// kernel: tpu_custom_call.1
$region0: #{tpu_custom_call.1}
  #allocation0 [shape = 'u32[]', space=smem, size = 0x4, offset = 0x4, fixed_abs, tag = 'smem constant byte address 0x4 - core index']
  #allocation1 [shape = 'u32[72,128]{1,0:T(1,128)}', space=vmem, size = 0x9000, scoped, tag = 'internal scratch']
  %s0 = inlined_call_operand.hbm [shape: f32[2,256], index: 0, kind: input, shape index: {}]
  %s1 = inlined_call_operand.hbm [shape: f32[2,256], index: 1, kind: input, shape index: {}]
  %s2 = inlined_call_operand.hbm [shape: f32[4,512], index: 2, kind: input, shape index: {}]
  %s3 = inlined_call_operand.hbm [shape: f32[1,1,1], index: 3, kind: output, shape index: {}]
  %s4 = sld [smem:[#allocation0]]
  $region34: #{tpu_custom_call.1} parent=0
    _
  %s6 = ssub.s32 1, %s4
  %s7 = scalar_select 0, %s6, %s4
  $region1: #{tpu_custom_call.1} parent=0
    #allocation2 [shape = 'u8[2048]{0}', space=vmem, size = 0x800, scoped, tag = 'input window, operand 0, single buffered']
    #allocation3 [shape = 's32[1]{0}', space=sflag, size = 0x4, scoped, tag = 'scoped memory for tpu_custom_call.1']
    #allocation4 [shape = 's32[1]{0}', space=sflag, size = 0x4, scoped, tag = 'scoped memory for tpu_custom_call.1']
    #allocation5 [shape = 'u8[2048]{0}', space=vmem, size = 0x800, scoped, tag = 'input window, operand 1, single buffered']
    #allocation6 [shape = 's32[1]{0}', space=sflag, size = 0x4, scoped, tag = 'scoped memory for tpu_custom_call.1']
    #allocation7 [shape = 'u8[8192]{0}', space=vmem, size = 0x2000, scoped, tag = 'input window, operand 2, single buffered']
    #allocation8 [shape = 'u8[512]{0}', space=vmem, size = 0x400, scoped, tag = 'output window, operand 0, single buffered']
    %8 = vsyncpa [#allocation3], 0
    %9 = vsyncpa [#allocation6], 0
    %10 = vsyncpa [#allocation4], 0
    // Predicated region
    $region2: #{tpu_custom_call.1} parent=1 // pred_check
      _
    $region3: #{tpu_custom_call.1} parent=1 // pred_check_branch
      %12 = sbr.rel (0) target = $region5
    $region4: #{tpu_custom_call.1} parent=1 // pred_region
      %14 = vsyncadd [#allocation3], 0
      %s16 = sshll.u32 %s0, 4
      %s17 = int_to_ptr.hbm [resolvable:$true] %s16
      %s18 = sshll.u32 [#allocation2], 4
      %s19 = int_to_ptr.vmem [resolvable:$true] %s18
      %21 = dma.hbm_to_vmem [thread:$0]  %s17, 64, %s19, [#allocation3]
    $region5: #{tpu_custom_call.1} parent=1 // pred_fallthru
      _
    // Predicated region
    $region6: #{tpu_custom_call.1} parent=1 // pred_check
      _
    $region7: #{tpu_custom_call.1} parent=1 // pred_check_branch
      %23 = sbr.rel (0) target = $region9
    $region8: #{tpu_custom_call.1} parent=1 // pred_region
      %25 = vsyncadd [#allocation6], 0
      %s27 = sshll.u32 %s1, 4
      %s28 = int_to_ptr.hbm [resolvable:$true] %s27
      %s29 = sshll.u32 [#allocation5], 4
      %s30 = int_to_ptr.vmem [resolvable:$true] %s29
      %32 = dma.hbm_to_vmem [thread:$0]  %s28, 64, %s30, [#allocation6]
    $region9: #{tpu_custom_call.1} parent=1 // pred_fallthru
      _
    // Predicated region
    $region10: #{tpu_custom_call.1} parent=1 // pred_check
      _
    $region11: #{tpu_custom_call.1} parent=1 // pred_check_branch
      %34 = sbr.rel (0) target = $region13
    $region12: #{tpu_custom_call.1} parent=1 // pred_region
      %36 = vsyncadd [#allocation6], 0
      %s38 = sshll.u32 %s2, 4
      %s39 = int_to_ptr.hbm [resolvable:$true] %s38
      %s40 = sshll.u32 [#allocation7], 4
      %s41 = int_to_ptr.vmem [resolvable:$true] %s40
      %43 = dma.hbm_to_vmem [thread:$0]  %s39, 256, %s41, [#allocation6]
    $region13: #{tpu_custom_call.1} parent=1 // pred_fallthru
      _
    // Predicated region
    $region14: #{tpu_custom_call.1} parent=1 // pred_check
      _
    $region15: #{tpu_custom_call.1} parent=1 // pred_check_branch
      %45 = sbr.rel (0) target = $region17
    $region16: #{tpu_custom_call.1} parent=1 // pred_region
      %47 = dma.done [#allocation3], 64
    $region17: #{tpu_custom_call.1} parent=1 // pred_fallthru
      _
    // Predicated region
    $region18: #{tpu_custom_call.1} parent=1 // pred_check
      _
    $region19: #{tpu_custom_call.1} parent=1 // pred_check_branch
      %49 = sbr.rel (0) target = $region21
    $region20: #{tpu_custom_call.1} parent=1 // pred_region
      %51 = dma.done [#allocation6], 64
    $region21: #{tpu_custom_call.1} parent=1 // pred_fallthru
      _
    // Predicated region
    $region22: #{tpu_custom_call.1} parent=1 // pred_check
      _
    $region23: #{tpu_custom_call.1} parent=1 // pred_check_branch
      %53 = sbr.rel (0) target = $region25
    $region24: #{tpu_custom_call.1} parent=1 // pred_region
      %55 = dma.done [#allocation6], 256
    $region25: #{tpu_custom_call.1} parent=1 // pred_fallthru
      _
    %v56 = vld [vmem:[#allocation7] ss:$4 sm:$0xf]
    %s57 = scalar_lea.vmem [#allocation7], 1
    %v58 = vld [vmem:[%s57] ss:$4 sm:$0xf]
    %s59 = scalar_lea.vmem [#allocation7], 2
    %v60 = vld [vmem:[%s59] ss:$4 sm:$0xf]
    %s61 = scalar_lea.vmem [#allocation7], 3
    %v62 = vld [vmem:[%s61] ss:$4 sm:$0xf]
    %v63 = vld [vmem:[#allocation2] sm:$0xf]
    %v64 = vld [vmem:[#allocation5] sm:$0xf]
    %66 = vst [vmem:[#allocation1] ss:$4 sm:$0xff] %v63
    %v67 = vld.sshfl [vmem:[#allocation1] sm:$0xff pattern:$0x73625140]
    %v68 = vld.sshfl [vmem:[#allocation1 + $0x8] sm:$0xff pattern:$0x73625140]
    %72 = vst [vmem:[#allocation1] ss:$4 sm:$0xff] %v64
    %v73 = vld.sshfl [vmem:[#allocation1] sm:$0xff pattern:$0x73625140]
    %v74 = vld.sshfl [vmem:[#allocation1 + $0x8] sm:$0xff pattern:$0x73625140]
    %77 = vrot.lane.b32.xlu0 %v67, 112
    %v78 = vpop.permute.xlu0 %77
    %79 = vrot.lane.b32.xlu0 %v68, 112
    %v80 = vpop.permute.xlu0 %79
    %81 = vrot.lane.b32.xlu0 %v73, 112
    %v82 = vpop.permute.xlu0 %81
    %83 = vrot.lane.b32.xlu0 %v74, 112
    %v84 = vpop.permute.xlu0 %83
    %vm85 = vcmask 916480
    %v86 = vsel %vm85, %v78, %v80
    %v87 = vsel %vm85, %v80, %v82
    %v88 = vsel %vm85, %v82, %v84
    %v93 = vsel %vm85, %v84, 0.0
    %v95 = vperm.slane %v62, 0
    %v96 = vperm.slane %v62, 1
    %v97 = vperm.slane %v62, 2
    %v98 = vperm.slane %v62, 3
    %v103 = vmul.f32 %v86, %v95
    %v104 = vmul.f32 %v87, %v96
    %v105 = vmul.f32 %v88, %v97
    %v106 = vmul.f32 %v93, %v98
    %107 = vrot.lane.b32.xlu0 %v67, 16
    %v108 = vpop.permute.xlu0 %107
    %109 = vrot.lane.b32.xlu0 %v68, 16
    %v110 = vpop.permute.xlu0 %109
    %111 = vrot.lane.b32.xlu0 %v73, 16
    %v112 = vpop.permute.xlu0 %111
    %113 = vrot.lane.b32.xlu0 %v74, 16
    %v114 = vpop.permute.xlu0 %113
    %vm115 = vcmask 130048
    %v116 = vsel %vm115, %v108, %v110
    %v117 = vsel %vm115, %v110, %v112
    %v118 = vsel %vm115, %v112, %v114
    %v123 = vsel %vm115, 0.0, %v108
    %v125 = vperm.slane %v60, 0
    %v126 = vperm.slane %v60, 1
    %v127 = vperm.slane %v60, 2
    %v128 = vperm.slane %v60, 3
    %v133 = vmul.f32 %v123, %v125
    %v134 = vmul.f32 %v116, %v126
    %v135 = vmul.f32 %v117, %v127
    %v136 = vmul.f32 %v118, %v128
    %v137 = vmul.f32 %v67, 2.0
    %v138 = vmul.f32 %v68, 2.0
    %v139 = vmul.f32 %v73, 2.0
    %v140 = vmul.f32 %v74, 2.0
    %v141 = vadd.f32 %v133, %v137
    %v142 = vadd.f32 %v134, %v138
    %v143 = vadd.f32 %v135, %v139
    %v144 = vadd.f32 %v136, %v140
    %v145 = vadd.f32 %v141, %v103
    %v146 = vadd.f32 %v142, %v104
    %v147 = vadd.f32 %v143, %v105
    %v148 = vadd.f32 %v144, %v106
    %v149 = vsub.f32 %v103, %v133
    %v150 = vsub.f32 %v104, %v134
    %v151 = vsub.f32 %v105, %v135
    %v152 = vsub.f32 %v106, %v136
    %157 = vrot.lane.b32.xlu0 %v145, 127
    %v158 = vpop.permute.xlu0 %157
    %159 = vrot.lane.b32.xlu0 %v146, 127
    %v160 = vpop.permute.xlu0 %159
    %161 = vrot.lane.b32.xlu0 %v147, 127
    %v162 = vpop.permute.xlu0 %161
    %163 = vrot.lane.b32.xlu0 %v148, 127
    %v164 = vpop.permute.xlu0 %163
    %vm165 = vcmask 1039360
    %v166 = vsel %vm165, %v158, %v160
    %v167 = vsel %vm165, %v160, %v162
    %v168 = vsel %vm165, %v162, %v164
    %v173 = vsel %vm165, %v164, 0.0
    %v175 = vperm.slane %v58, 0
    %v176 = vperm.slane %v58, 1
    %v177 = vperm.slane %v58, 2
    %v178 = vperm.slane %v58, 3
    %v183 = vmul.f32 %v166, %v175
    %v184 = vmul.f32 %v167, %v176
    %v185 = vmul.f32 %v168, %v177
    %v186 = vmul.f32 %v173, %v178
    %187 = vrot.lane.b32.xlu0 %v145, 1
    %v188 = vpop.permute.xlu0 %187
    %189 = vrot.lane.b32.xlu0 %v146, 1
    %v190 = vpop.permute.xlu0 %189
    %191 = vrot.lane.b32.xlu0 %v147, 1
    %v192 = vpop.permute.xlu0 %191
    %193 = vrot.lane.b32.xlu0 %v148, 1
    %v194 = vpop.permute.xlu0 %193
    %vm195 = vcmask 7168
    %v196 = vsel %vm195, %v188, %v190
    %v197 = vsel %vm195, %v190, %v192
    %v198 = vsel %vm195, %v192, %v194
    %v203 = vsel %vm195, 0.0, %v188
    %v205 = vperm.slane %v56, 0
    %v206 = vperm.slane %v56, 1
    %v207 = vperm.slane %v56, 2
    %v208 = vperm.slane %v56, 3
    %v213 = vmul.f32 %v203, %v205
    %v214 = vmul.f32 %v196, %v206
    %v215 = vmul.f32 %v197, %v207
    %v216 = vmul.f32 %v198, %v208
    %221 = vrot.lane.b32.xlu0 %v149, 127
    %v222 = vpop.permute.xlu0 %221
    %223 = vrot.lane.b32.xlu0 %v150, 127
    %v224 = vpop.permute.xlu0 %223
    %225 = vrot.lane.b32.xlu0 %v151, 127
    %v226 = vpop.permute.xlu0 %225
    %227 = vrot.lane.b32.xlu0 %v152, 127
    %v228 = vpop.permute.xlu0 %227
    %v229 = vsel %vm165, %v222, %v224
    %v230 = vsel %vm165, %v224, %v226
    %v231 = vsel %vm165, %v226, %v228
    %v236 = vsel %vm165, %v228, 0.0
    %v237 = vmul.f32 %v229, %v175
    %v238 = vmul.f32 %v230, %v176
    %v239 = vmul.f32 %v231, %v177
    %v240 = vmul.f32 %v236, %v178
    %241 = vrot.lane.b32.xlu0 %v149, 1
    %v242 = vpop.permute.xlu0 %241
    %243 = vrot.lane.b32.xlu0 %v150, 1
    %v244 = vpop.permute.xlu0 %243
    %245 = vrot.lane.b32.xlu0 %v151, 1
    %v246 = vpop.permute.xlu0 %245
    %247 = vrot.lane.b32.xlu0 %v152, 1
    %v248 = vpop.permute.xlu0 %247
    %v249 = vsel %vm195, %v242, %v244
    %v250 = vsel %vm195, %v244, %v246
    %v251 = vsel %vm195, %v246, %v248
    %v256 = vsel %vm195, 0.0, %v242
    %v257 = vmul.f32 %v256, %v205
    %v258 = vmul.f32 %v249, %v206
    %v259 = vmul.f32 %v250, %v207
    %v260 = vmul.f32 %v251, %v208
    %v261 = vsub.f32 %v183, %v213
    %v262 = vsub.f32 %v184, %v214
    %v263 = vsub.f32 %v185, %v215
    %v264 = vsub.f32 %v186, %v216
    %v265 = vmul.f32 %v149, 2.0
    %v266 = vmul.f32 %v150, 2.0
    %v267 = vmul.f32 %v151, 2.0
    %v268 = vmul.f32 %v152, 2.0
    %v269 = vadd.f32 %v257, %v265
    %v270 = vadd.f32 %v258, %v266
    %v271 = vadd.f32 %v259, %v267
    %v272 = vadd.f32 %v260, %v268
    %v273 = vadd.f32 %v269, %v237
    %v274 = vadd.f32 %v270, %v238
    %v275 = vadd.f32 %v271, %v239
    %v276 = vadd.f32 %v272, %v240
    %v277 = vmul.f32 %v261, %v261
    %v278 = vmul.f32 %v262, %v262
    %v279 = vmul.f32 %v263, %v263
    %v280 = vmul.f32 %v264, %v264
    %v281 = vmul.f32 %v273, %v273
    %v282 = vmul.f32 %v274, %v274
    %v283 = vmul.f32 %v275, %v275
    %v284 = vmul.f32 %v276, %v276
    %v285 = vadd.f32 %v277, %v281
    %v286 = vadd.f32 %v278, %v282
    %v287 = vadd.f32 %v279, %v283
    %v288 = vadd.f32 %v280, %v284
    %v289 = vadd.f32 %v285, 1e-08
    %v290 = vadd.f32 %v286, 1e-08
    %v291 = vadd.f32 %v287, 1e-08
    %v292 = vadd.f32 %v288, 1e-08
    %v293 = vrsqrt.pop %v289
    %v294 = vmul.f32 %v293, %v289
    %v295 = vmul.f32 %v294, %v293
    %v296 = vmul.f32 0.5, %v295
    %v297 = vsub.f32 1.5, %v296
    %v298 = vmul.f32 %v293, %v297
    %v299 = vmul.f32 %v289, %v298
    %vm300 = vcmp.eq.f32.partialorder %v289, inf
    %v301 = vsel %vm300, %v289, %v299
    %vm302 = vcmp.eq.f32.partialorder %v289, 0.0
    %v303 = vand.u32 %v289, 2147483648
    %v304 = vsel %vm302, %v303, %v301
    %v305 = vrsqrt.pop %v290
    %v306 = vmul.f32 %v305, %v290
    %v307 = vmul.f32 %v306, %v305
    %v308 = vmul.f32 0.5, %v307
    %v309 = vsub.f32 1.5, %v308
    %v310 = vmul.f32 %v305, %v309
    %v311 = vmul.f32 %v290, %v310
    %vm312 = vcmp.eq.f32.partialorder %v290, inf
    %v313 = vsel %vm312, %v290, %v311
    %vm314 = vcmp.eq.f32.partialorder %v290, 0.0
    %v315 = vand.u32 %v290, 2147483648
    %v316 = vsel %vm314, %v315, %v313
    %v317 = vrsqrt.pop %v291
    %v318 = vmul.f32 %v317, %v291
    %v319 = vmul.f32 %v318, %v317
    %v320 = vmul.f32 0.5, %v319
    %v321 = vsub.f32 1.5, %v320
    %v322 = vmul.f32 %v317, %v321
    %v323 = vmul.f32 %v291, %v322
    %vm324 = vcmp.eq.f32.partialorder %v291, inf
    %v325 = vsel %vm324, %v291, %v323
    %vm326 = vcmp.eq.f32.partialorder %v291, 0.0
    %v327 = vand.u32 %v291, 2147483648
    %v328 = vsel %vm326, %v327, %v325
    %v329 = vrsqrt.pop %v292
    %v330 = vmul.f32 %v329, %v292
    %v331 = vmul.f32 %v330, %v329
    %v332 = vmul.f32 0.5, %v331
    %v333 = vsub.f32 1.5, %v332
    %v334 = vmul.f32 %v329, %v333
    %v335 = vmul.f32 %v292, %v334
    %vm336 = vcmp.eq.f32.partialorder %v292, inf
    %v337 = vsel %vm336, %v292, %v335
    %vm338 = vcmp.eq.f32.partialorder %v292, 0.0
    %v339 = vand.u32 %v292, 2147483648
    %v340 = vsel %vm338, %v339, %v337
    %v341 = vsub.f32 %v304, %v328
    %v342 = vsub.f32 %v316, %v340
    %v343 = vand.u32 2147483647, %v341
    %v344 = vand.u32 2147483647, %v342
    %vm345 = vcmask 1041408
    %v346 = vsel %vm345, %v343, 0.0
    %v347 = vsel %vm345, %v344, 0.0
    %v348 = vadd.f32 %v346, %v347
    %349 = vadd.xlane.f32.xlu0 %v348
    %v350 = vpop.xlane.xlu0 %349
    %v351 = vrot.slane %v350, 4
    %v352 = vadd.f32 %v350, %v351
    %v353 = vrot.slane %v352, 2
    %v354 = vadd.f32 %v352, %v353
    %v355 = vrot.slane %v354, 1
    %v356 = vadd.f32 %v354, %v355
    %s357 = vtos %v356
    %v358 = vstv %s357
    %vm359 = vcmask 0
    %360 = vst.msk [vmem:[#allocation8] sm:$0x1] %vm359, %v358
    // Predicated region
    $region26: #{tpu_custom_call.1} parent=1 // pred_check
      _
    $region27: #{tpu_custom_call.1} parent=1 // pred_check_branch
      %362 = sbr.rel (0) target = $region29
    $region28: #{tpu_custom_call.1} parent=1 // pred_region
      %364 = vsyncadd [#allocation4], 0
      %s366 = sshll.u32 [#allocation8], 4
      %s367 = int_to_ptr.vmem [resolvable:$true] %s366
      %s368 = sshll.u32 %s3, 4
      %s369 = int_to_ptr.hbm [resolvable:$true] %s368
      %371 = dma.vmem_to_hbm [thread:$0]  %s367, 16, %s369, [#allocation4]
    $region29: #{tpu_custom_call.1} parent=1 // pred_fallthru
      _
    // Predicated region
    $region30: #{tpu_custom_call.1} parent=1 // pred_check
      _
    $region31: #{tpu_custom_call.1} parent=1 // pred_check_branch
      %373 = sbr.rel (0) target = $region33
    $region32: #{tpu_custom_call.1} parent=1 // pred_region
      %375 = dma.done [#allocation4], 16
    $region33: #{tpu_custom_call.1} parent=1 // pred_fallthru
      _
    %376 = vsyncpa [#allocation3], 1
    %377 = vsyncpa [#allocation6], 1
    %378 = vsyncpa [#allocation4], 1

</llo_original>
